<compile_context>
chip_gen: v6e
topology: v6e:2x2x1
jax: 0.10.0
libtpu: 0.0.40
codegen_flags: <defaults>
</compile_context>

<pallas_src>
import jax
import jax.numpy as jnp
from jax.experimental import pallas as pl
from jax.experimental.pallas import tpu as pltpu

NUM_SHAPE = 40
NUM_EXPR = 10
NUM_EIGVECS = NUM_SHAPE + NUM_EXPR  # 50
NUM_KEYPTS = 68
DIM = 3
FLAT = NUM_KEYPTS * DIM  # 204
MAX_TILE_B = 8192        # ~24-33 MiB of VMEM double-buffered; see vmem_limit below


def _round_up(x, m):
    return (x + m - 1) // m * m


def _deform_kernel(params_ref, basis_ref, mean_ref, out_ref):
    # params_ref: (TB, 50) f32, basis_ref: (50, 204) f32, mean_ref: (1, 204) f32
    # out_ref:    (TB, 204) f32
    acc = jnp.dot(params_ref[...], basis_ref[...],
                  preferred_element_type=jnp.float32,
                  precision=jax.lax.Precision.HIGHEST)
    out_ref[...] = acc + mean_ref[...]


@jax.jit
def deformable_head_keypoints(shapeparams, keyeigvecs, keypts):
    """shapeparams: (..., 50) f32; keyeigvecs: (50, 68, 3); keypts: (68, 3).

    Returns (..., 68, 3) f32, matching DeformableHeadKeypoints.forward.
    """
    shapeparams = shapeparams.astype(jnp.float32)
    batch_shape = shapeparams.shape[:-1]
    params2d = shapeparams.reshape((-1, NUM_EIGVECS))
    b = params2d.shape[0]

    if b == 0:
        return jnp.zeros(batch_shape + (NUM_KEYPTS, DIM), jnp.float32)

    # Flatten the eigenbasis and mean keypoints; keep the lane width at 204
    # (the block's last dim equals the full array dim, which is legal).
    basis2d = keyeigvecs.astype(jnp.float32).reshape((NUM_EIGVECS, FLAT))
    mean2d = keypts.astype(jnp.float32).reshape((1, FLAT))

    # Tile selection: sublane-aligned batch, >=2 grid steps when possible
    # (v7x dual TensorCore), tile capped at MAX_TILE_B, padding <= 8*steps rows.
    b8 = _round_up(b, 8)
    min_steps = 2 if b8 >= 16 else 1
    steps = max(min_steps, pl.cdiv(b8, MAX_TILE_B))
    tb = _round_up(pl.cdiv(b8, steps), 8)
    b_pad = _round_up(b8, tb)
    if b_pad != b:
        params2d = jnp.pad(params2d, ((0, b_pad - b), (0, 0)))

    grid = (b_pad // tb,)

    cost = pl.CostEstimate(
        flops=2 * b_pad * NUM_EIGVECS * FLAT,
        transcendentals=0,
        bytes_accessed=4 * (b_pad * NUM_EIGVECS      # params read
                            + b_pad * FLAT           # output write
                            + NUM_EIGVECS * FLAT     # basis read
                            + FLAT),                 # mean read
    )

    out2d = pl.pallas_call(
        _deform_kernel,
        out_shape=jax.ShapeDtypeStruct((b_pad, FLAT), jnp.float32),
        grid_spec=pltpu.PrefetchScalarGridSpec(
            num_scalar_prefetch=0,
            grid=grid,
            in_specs=[
                # Batch-tiled params; basis and mean stay resident across steps.
                pl.BlockSpec((tb, NUM_EIGVECS), lambda i: (i, 0)),
                pl.BlockSpec((NUM_EIGVECS, FLAT), lambda i: (0, 0)),
                pl.BlockSpec((1, FLAT), lambda i: (0, 0)),
            ],
            out_specs=pl.BlockSpec((tb, FLAT), lambda i: (i, 0)),
        ),
        compiler_params=pltpu.CompilerParams(
            dimension_semantics=("parallel",),
            vmem_limit_bytes=48 * 1024 * 1024),
        cost_estimate=cost,
    )(params2d, basis2d, mean2d)

    if b_pad != b:
        out2d = out2d[:b]
    # NOTE: the (..., 68, 3) layout mandated by the module is lane-sparse; if a
    # downstream consumer could take (..., 204) this reshape/relayout copy
    # would be avoidable.
    return out2d.reshape(batch_shape + (NUM_KEYPTS, DIM))


def make_synthetic_buffers(key):
    """Deterministic stand-ins for the BFM keypoints / eigenbasis buffers."""
    # TODO(synk): real module loads BFMModel() vertex/basis data from disk;
    # here we synthesize deterministic buffers of the correct shapes instead.
    k1, k2 = jax.random.split(key)
    keypts = jax.random.normal(k1, (NUM_KEYPTS, DIM), dtype=jnp.float32)
    keyeigvecs = 0.1 * jax.random.normal(
        k2, (NUM_EIGVECS, NUM_KEYPTS, DIM), dtype=jnp.float32)
    return keypts, keyeigvecs


def reference(shapeparams, keyeigvecs, keypts):
    # Pure-JAX reference of the PyTorch forward.
    local = jnp.sum(keyeigvecs * shapeparams[..., None, None], axis=-3)
    return local + keypts


if __name__ == "__main__":
    key = jax.random.PRNGKey(0)
    kbuf, kparam1, kparam2, kparam3 = jax.random.split(key, 4)
    keypts, keyeigvecs = make_synthetic_buffers(kbuf)

    # Small 2-D-batch case (batch=2): single grid step, padded rows 2 -> 8.
    batch = 2
    shapeparams = jax.random.normal(
        kparam1, (batch, NUM_EIGVECS), dtype=jnp.float32)
    out = deformable_head_keypoints(shapeparams, keyeigvecs, keypts)
    out = jax.block_until_ready(out)
    assert out.shape == (batch, NUM_KEYPTS, DIM), out.shape
    ref = reference(shapeparams, keyeigvecs, keypts)
    assert jnp.allclose(out, ref, atol=1e-4, rtol=1e-4), \
        float(jnp.max(jnp.abs(out - ref)))

    # Multi-dim batch case (3*5=15 rows): exercises flatten/reshape, row
    # padding (15 -> 16) and the 2-step grid path.
    shapeparams2 = jax.random.normal(
        kparam2, (3, 5, NUM_EIGVECS), dtype=jnp.float32)
    out2 = deformable_head_keypoints(shapeparams2, keyeigvecs, keypts)
    out2 = jax.block_until_ready(out2)
    assert out2.shape == (3, 5, NUM_KEYPTS, DIM), out2.shape
    ref2 = reference(shapeparams2, keyeigvecs, keypts)
    assert jnp.allclose(out2, ref2, atol=1e-4, rtol=1e-4), \
        float(jnp.max(jnp.abs(out2 - ref2)))

    # Medium batch (37): tb derived from batch (no over-padding to a fixed
    # tile), multi-step grid with row slicing at the end.
    shapeparams3 = jax.random.normal(
        kparam3, (37, NUM_EIGVECS), dtype=jnp.float32)
    out3 = deformable_head_keypoints(shapeparams3, keyeigvecs, keypts)
    out3 = jax.block_until_ready(out3)
    assert out3.shape == (37, NUM_KEYPTS, DIM), out3.shape
    ref3 = reference(shapeparams3, keyeigvecs, keypts)
    assert jnp.allclose(out3, ref3, atol=1e-4, rtol=1e-4), \
        float(jnp.max(jnp.abs(out3 - ref3)))

    print("KERNEL_OK")
</pallas_src>

<mosaic_0001>
module attributes {stable_mosaic.version = 11 : i64} {
  func.func @_deform_kernel(%arg0: i32, %arg1: memref<8x50xf32, #tpu.memory_space<vmem>>, %arg2: memref<50x204xf32, #tpu.memory_space<vmem>>, %arg3: memref<1x204xf32, #tpu.memory_space<vmem>>, %arg4: memref<8x204xf32, #tpu.memory_space<vmem>>) attributes {dimension_semantics = [#tpu.dimension_semantics<parallel>], iteration_bounds = array<i64: 1>, scalar_prefetch = 0 : i64, scratch_operands = 0 : i64, tpu.core_type = #tpu.core_type<tc>, window_params = [{transform_indices = @transform_0, window_bounds = array<i64: 8, 50>}, {pipeline_mode = #tpu.pipeline_mode<synchronous>, transform_indices = @transform_1, window_bounds = array<i64: 50, 204>}, {pipeline_mode = #tpu.pipeline_mode<synchronous>, transform_indices = @transform_2, window_bounds = array<i64: 1, 204>}, {transform_indices = @transform_3, window_bounds = array<i64: 8, 204>}]} {
    %c0 = arith.constant 0 : index
    %c0_0 = arith.constant 0 : index
    %0 = vector.load %arg1[%c0, %c0_0] : memref<8x50xf32, #tpu.memory_space<vmem>>, vector<8x50xf32>
    %c0_1 = arith.constant 0 : index
    %c0_2 = arith.constant 0 : index
    %1 = vector.load %arg2[%c0_1, %c0_2] : memref<50x204xf32, #tpu.memory_space<vmem>>, vector<50x204xf32>
    %cst = arith.constant dense<0.000000e+00> : vector<8x204xf32>
    %2 = tpu.matmul %0, %1, %cst {dimension_numbers = #tpu.dot_dimension_numbers<[1], [0], [0], [1], [0, 0, 1, 1], [], []>, precision = #tpu.contract_precision<fp32>} : vector<8x50xf32>, vector<50x204xf32>, vector<8x204xf32> -> vector<8x204xf32>
    %c0_3 = arith.constant 0 : index
    %c0_4 = arith.constant 0 : index
    %3 = vector.load %arg3[%c0_3, %c0_4] : memref<1x204xf32, #tpu.memory_space<vmem>>, vector<1x204xf32>
    %4 = vector.broadcast %3 : vector<1x204xf32> to vector<8x204xf32>
    %5 = arith.addf %2, %4 : vector<8x204xf32>
    %c0_5 = arith.constant 0 : index
    %c0_6 = arith.constant 0 : index
    %6 = vector.load %arg4[%c0_5, %c0_6] : memref<8x204xf32, #tpu.memory_space<vmem>>, vector<8x204xf32>
    tpu.vector_store %arg4[%c0_5, %c0_6], %5 {strides = array<i32>} : memref<8x204xf32, #tpu.memory_space<vmem>>, vector<8x204xf32>,
    return
  }
  func.func @transform_0(%arg0: i32) -> (i32, i32) {
    %c0_i32 = arith.constant 0 : i32
    %c0_i32_0 = arith.constant 0 : i32
    return %arg0, %c0_i32 : i32, i32
  }
  func.func @transform_1(%arg0: i32) -> (i32, i32) {
    %c0_i32 = arith.constant 0 : i32
    %c0_i32_0 = arith.constant 0 : i32
    %c0_i32_1 = arith.constant 0 : i32
    return %c0_i32, %c0_i32_0 : i32, i32
  }
  func.func @transform_2(%arg0: i32) -> (i32, i32) {
    %c0_i32 = arith.constant 0 : i32
    %c0_i32_0 = arith.constant 0 : i32
    %c0_i32_1 = arith.constant 0 : i32
    return %c0_i32, %c0_i32_0 : i32, i32
  }
  func.func @transform_3(%arg0: i32) -> (i32, i32) {
    %c0_i32 = arith.constant 0 : i32
    %c0_i32_0 = arith.constant 0 : i32
    return %arg0, %c0_i32 : i32, i32
  }
}

</mosaic_0001>

<llo_original>
// kernel: deformable_head_keypoints.1
$region0: #{deformable_head_keypoints.1}
  #allocation0 [shape = 'u32[]', space=smem, size = 0x4, offset = 0x4, fixed_abs, tag = 'smem constant byte address 0x4 - core index']
  #allocation1 [shape = 'u32[144,128]{1,0:T(1,128)}', space=vmem, size = 0x12000, scoped, tag = 'internal scratch']
  %s0 = inlined_call_operand.vmem [shape: f32[8,50], index: 0, kind: input, shape index: {}]
  %s1 = inlined_call_operand.vmem [shape: f32[50,204], index: 1, kind: input, shape index: {}]
  %s2 = inlined_call_operand.vmem [shape: f32[1,204], index: 2, kind: input, shape index: {}]
  %s3 = inlined_call_operand.vmem [shape: f32[8,204], index: 3, kind: output, shape index: {}]
  %s4 = sld [smem:[#allocation0]]
  $region22: #{deformable_head_keypoints.1} parent=0
    _
  %s6 = ssub.s32 1, %s4
  %s7 = scalar_select 0, %s6, %s4
  // Predicated region
  $region2: #{deformable_head_keypoints.1} parent=0 // pred_check
    _
  $region3: #{deformable_head_keypoints.1} parent=0 // pred_check_branch
    %9 = sbr.rel (0) target = $region5
  $region4: #{deformable_head_keypoints.1} parent=0 // pred_region
    _
  $region5: #{deformable_head_keypoints.1} parent=0 // pred_fallthru
    _
  // Predicated region
  $region6: #{deformable_head_keypoints.1} parent=0 // pred_check
    _
  $region7: #{deformable_head_keypoints.1} parent=0 // pred_check_branch
    %11 = sbr.rel (0) target = $region9
  $region8: #{deformable_head_keypoints.1} parent=0 // pred_region
    _
  $region9: #{deformable_head_keypoints.1} parent=0 // pred_fallthru
    _
  // Predicated region
  $region10: #{deformable_head_keypoints.1} parent=0 // pred_check
    _
  $region11: #{deformable_head_keypoints.1} parent=0 // pred_check_branch
    %13 = sbr.rel (0) target = $region13
  $region12: #{deformable_head_keypoints.1} parent=0 // pred_region
    _
  $region13: #{deformable_head_keypoints.1} parent=0 // pred_fallthru
    _
  %v14 = vld [vmem:[%s0] sm:$0xff]
  %v15 = vld [vmem:[%s1] sm:$0xff]
  %v16 = vld [vmem:[%s1 + $0x8] sm:$0xff]
  %v17 = vld [vmem:[%s1 + $0x10] sm:$0xff]
  %v18 = vld [vmem:[%s1 + $0x18] sm:$0xff]
  %v19 = vld [vmem:[%s1 + $0x20] sm:$0xff]
  %v20 = vld [vmem:[%s1 + $0x28] sm:$0xff]
  %v21 = vld [vmem:[%s1 + $0x30] sm:$0xff]
  %v22 = vld [vmem:[%s1 + $0x38] sm:$0xff]
  %v23 = vld [vmem:[%s1 + $0x40] sm:$0xff]
  %v24 = vld [vmem:[%s1 + $0x48] sm:$0xff]
  %v25 = vld [vmem:[%s1 + $0x50] sm:$0xff]
  %v26 = vld [vmem:[%s1 + $0x58] sm:$0xff]
  %v27 = vld [vmem:[%s1 + $0x60] sm:$0x3]
  %v28 = vld [vmem:[%s1 + $0x68] sm:$0x3]
  %v29 = vld [vmem:[%s2] sm:$0x3]
  %v31 = vlaneseq
  %v32 = vshrl.u32 %v31, 7
  %v33 = vsub.s32 0, %v32
  %v34 = vrot.slane %v29, %v33
  %v35 = vlaneseq
  %v36 = vshrl.u32 %v35, 7
  %v37 = vsub.s32 1, %v36
  %v38 = vrot.slane %v29, %v37
  %vm41 = vcmask 408576
  %v43 = vsel %vm41, %v14, 0
  %vm45 = vcmask 1041408
  %v47 = vsel %vm45, %v27, 0
  %v50 = vsel %vm45, %v28, 0
  %52 = vmatprep.subr.mxu0 0.0
  %53 = vmatpush1.msra.mxu0 0.0
  %54 = vmatprep.subr.mxu0 0.0
  %55 = vmatpush1.msra.mxu0 0.0
  %56 = vmatprep.subr.mxu0 0.0
  %57 = vmatpush1.msra.mxu0 0.0
  %58 = vmatprep.subr.mxu0 0.0
  %59 = vmatpush1.msra.mxu0 0.0
  %60 = vmatprep.subr.mxu0 0.0
  %61 = vmatpush1.msra.mxu0 0.0
  %62 = vmatprep.subr.mxu0 0.0
  %63 = vmatpush1.msra.mxu0 0.0
  %64 = vmatprep.subr.mxu0 0.0
  %65 = vmatpush1.msra.mxu0 0.0
  %66 = vmatprep.subr.mxu0 0.0
  %67 = vmatpush1.msra.mxu0 0.0
  %68 = vmatprep.subr.mxu0 0.0
  %69 = vmatpush1.msra.mxu0 0.0
  %v70 = vand.u32 %v50, 4294901760
  %71 = vmatprep.subr.mxu0 %v70
  %v72 = vand.u32 %v47, 4294901760
  %73 = vmatpush1.msra.mxu0 %v72
  %v74 = vand.u32 %v26, 4294901760
  %75 = vmatprep.subr.mxu0 %v74
  %v76 = vand.u32 %v25, 4294901760
  %77 = vmatpush1.msra.mxu0 %v76
  %v78 = vand.u32 %v24, 4294901760
  %79 = vmatprep.subr.mxu0 %v78
  %v80 = vand.u32 %v23, 4294901760
  %81 = vmatpush1.msra.mxu0 %v80
  %v82 = vand.u32 %v22, 4294901760
  %83 = vmatprep.subr.mxu0 %v82
  %v84 = vand.u32 %v21, 4294901760
  %85 = vmatpush1.msra.mxu0 %v84
  %v86 = vand.u32 %v20, 4294901760
  %87 = vmatprep.subr.mxu0 %v86
  %v88 = vand.u32 %v19, 4294901760
  %89 = vmatpush1.msra.mxu0 %v88
  %v90 = vand.u32 %v18, 4294901760
  %91 = vmatprep.subr.mxu0 %v90
  %v92 = vand.u32 %v17, 4294901760
  %93 = vmatpush1.msra.mxu0 %v92
  %v94 = vand.u32 %v16, 4294901760
  %95 = vmatprep.subr.mxu0 %v94
  %v96 = vand.u32 %v15, 4294901760
  %97 = vmatpush1.msra.mxu0 %v96
  %98 = vmatprep.subr.mxu0 0.0
  %99 = vmatpush2.msra.mxu0 0.0
  %100 = vmatprep.subr.mxu0 0.0
  %101 = vmatpush2.msra.mxu0 0.0
  %102 = vmatprep.subr.mxu0 0.0
  %103 = vmatpush2.msra.mxu0 0.0
  %104 = vmatprep.subr.mxu0 0.0
  %105 = vmatpush2.msra.mxu0 0.0
  %106 = vmatprep.subr.mxu0 0.0
  %107 = vmatpush2.msra.mxu0 0.0
  %108 = vmatprep.subr.mxu0 0.0
  %109 = vmatpush2.msra.mxu0 0.0
  %110 = vmatprep.subr.mxu0 0.0
  %111 = vmatpush2.msra.mxu0 0.0
  %112 = vmatprep.subr.mxu0 0.0
  %113 = vmatpush2.msra.mxu0 0.0
  %114 = vmatprep.subr.mxu0 0.0
  %115 = vmatpush2.msra.mxu0 0.0
  %116 = vmatprep.subr.mxu0 0.0
  %117 = vmatpush2.msra.mxu0 0.0
  %118 = vmatprep.subr.mxu0 0.0
  %119 = vmatpush2.msra.mxu0 0.0
  %120 = vmatprep.subr.mxu0 0.0
  %121 = vmatpush2.msra.mxu0 0.0
  %122 = vmatprep.subr.mxu0 0.0
  %123 = vmatpush2.msra.mxu0 0.0
  %124 = vmatprep.subr.mxu0 0.0
  %125 = vmatpush2.msra.mxu0 0.0
  %126 = vmatprep.subr.mxu0 0.0
  %127 = vmatpush2.msra.mxu0 0.0
  %128 = vmatprep.subr.mxu0 0.0
  %129 = vmatpush2.msra.mxu0 0.0
  %130 = vmatprep.mubr.f32.mxu0 0.0
  %v131 = vand.u32 %v43, 4294901760
  %v132 = vsub.f32 %v43, %v131
  %v133 = vand.u32 %v132, 4294901760
  %v134 = vsub.f32 %v132, %v133
  %v135 = vand.u32 %v134, 4294901760
  %136 = vmatmul.mubr.f32.gmra.mxu0 %v135
  %v137 = vpop.f32.mrf.mxu0
  %v138 = vadd.f32 %v34, %v137
  %v139 = vpop.f32.mrf.mxu0
  %v140 = vadd.f32 %v38, %v139
  %141 = vdwg.mxu0
  %142 = vmatprep.subr.mxu0 0.0
  %143 = vmatpush1.msra.mxu0 0.0
  %144 = vmatprep.subr.mxu0 0.0
  %145 = vmatpush1.msra.mxu0 0.0
  %146 = vmatprep.subr.mxu0 0.0
  %147 = vmatpush1.msra.mxu0 0.0
  %148 = vmatprep.subr.mxu0 0.0
  %149 = vmatpush1.msra.mxu0 0.0
  %150 = vmatprep.subr.mxu0 0.0
  %151 = vmatpush1.msra.mxu0 0.0
  %152 = vmatprep.subr.mxu0 0.0
  %153 = vmatpush1.msra.mxu0 0.0
  %154 = vmatprep.subr.mxu0 0.0
  %155 = vmatpush1.msra.mxu0 0.0
  %156 = vmatprep.subr.mxu0 0.0
  %157 = vmatpush1.msra.mxu0 0.0
  %158 = vmatprep.subr.mxu0 0.0
  %159 = vmatpush1.msra.mxu0 0.0
  %v160 = vand.u32 %v50, 4294901760
  %v161 = vsub.f32 %v50, %v160
  %v162 = vand.u32 %v161, 4294901760
  %v163 = vsub.f32 %v161, %v162
  %v164 = vand.u32 %v163, 4294901760
  %165 = vmatprep.subr.mxu0 %v164
  %v166 = vand.u32 %v47, 4294901760
  %v167 = vsub.f32 %v47, %v166
  %v168 = vand.u32 %v167, 4294901760
  %v169 = vsub.f32 %v167, %v168
  %v170 = vand.u32 %v169, 4294901760
  %171 = vmatpush1.msra.mxu0 %v170
  %v172 = vand.u32 %v26, 4294901760
  %v173 = vsub.f32 %v26, %v172
  %v174 = vand.u32 %v173, 4294901760
  %v175 = vsub.f32 %v173, %v174
  %v176 = vand.u32 %v175, 4294901760
  %177 = vmatprep.subr.mxu0 %v176
  %v178 = vand.u32 %v25, 4294901760
  %v179 = vsub.f32 %v25, %v178
  %v180 = vand.u32 %v179, 4294901760
  %v181 = vsub.f32 %v179, %v180
  %v182 = vand.u32 %v181, 4294901760
  %183 = vmatpush1.msra.mxu0 %v182
  %v184 = vand.u32 %v24, 4294901760
  %v185 = vsub.f32 %v24, %v184
  %v186 = vand.u32 %v185, 4294901760
  %v187 = vsub.f32 %v185, %v186
  %v188 = vand.u32 %v187, 4294901760
  %189 = vmatprep.subr.mxu0 %v188
  %v190 = vand.u32 %v23, 4294901760
  %v191 = vsub.f32 %v23, %v190
  %v192 = vand.u32 %v191, 4294901760
  %v193 = vsub.f32 %v191, %v192
  %v194 = vand.u32 %v193, 4294901760
  %195 = vmatpush1.msra.mxu0 %v194
  %v196 = vand.u32 %v22, 4294901760
  %v197 = vsub.f32 %v22, %v196
  %v198 = vand.u32 %v197, 4294901760
  %v199 = vsub.f32 %v197, %v198
  %v200 = vand.u32 %v199, 4294901760
  %201 = vmatprep.subr.mxu0 %v200
  %v202 = vand.u32 %v21, 4294901760
  %v203 = vsub.f32 %v21, %v202
  %v204 = vand.u32 %v203, 4294901760
  %v205 = vsub.f32 %v203, %v204
  %v206 = vand.u32 %v205, 4294901760
  %207 = vmatpush1.msra.mxu0 %v206
  %v208 = vand.u32 %v20, 4294901760
  %v209 = vsub.f32 %v20, %v208
  %v210 = vand.u32 %v209, 4294901760
  %v211 = vsub.f32 %v209, %v210
  %v212 = vand.u32 %v211, 4294901760
  %213 = vmatprep.subr.mxu0 %v212
  %v214 = vand.u32 %v19, 4294901760
  %v215 = vsub.f32 %v19, %v214
  %v216 = vand.u32 %v215, 4294901760
  %v217 = vsub.f32 %v215, %v216
  %v218 = vand.u32 %v217, 4294901760
  %219 = vmatpush1.msra.mxu0 %v218
  %v220 = vand.u32 %v18, 4294901760
  %v221 = vsub.f32 %v18, %v220
  %v222 = vand.u32 %v221, 4294901760
  %v223 = vsub.f32 %v221, %v222
  %v224 = vand.u32 %v223, 4294901760
  %225 = vmatprep.subr.mxu0 %v224
  %v226 = vand.u32 %v17, 4294901760
  %v227 = vsub.f32 %v17, %v226
  %v228 = vand.u32 %v227, 4294901760
  %v229 = vsub.f32 %v227, %v228
  %v230 = vand.u32 %v229, 4294901760
  %231 = vmatpush1.msra.mxu0 %v230
  %v232 = vand.u32 %v16, 4294901760
  %v233 = vsub.f32 %v16, %v232
  %v234 = vand.u32 %v233, 4294901760
  %v235 = vsub.f32 %v233, %v234
  %v236 = vand.u32 %v235, 4294901760
  %237 = vmatprep.subr.mxu0 %v236
  %v238 = vand.u32 %v15, 4294901760
  %v239 = vsub.f32 %v15, %v238
  %v240 = vand.u32 %v239, 4294901760
  %v241 = vsub.f32 %v239, %v240
  %v242 = vand.u32 %v241, 4294901760
  %243 = vmatpush1.msra.mxu0 %v242
  %244 = vmatprep.subr.mxu0 0.0
  %245 = vmatpush2.msra.mxu0 0.0
  %246 = vmatprep.subr.mxu0 0.0
  %247 = vmatpush2.msra.mxu0 0.0
  %248 = vmatprep.subr.mxu0 0.0
  %249 = vmatpush2.msra.mxu0 0.0
  %250 = vmatprep.subr.mxu0 0.0
  %251 = vmatpush2.msra.mxu0 0.0
  %252 = vmatprep.subr.mxu0 0.0
  %253 = vmatpush2.msra.mxu0 0.0
  %254 = vmatprep.subr.mxu0 0.0
  %255 = vmatpush2.msra.mxu0 0.0
  %256 = vmatprep.subr.mxu0 0.0
  %257 = vmatpush2.msra.mxu0 0.0
  %258 = vmatprep.subr.mxu0 0.0
  %259 = vmatpush2.msra.mxu0 0.0
  %260 = vmatprep.subr.mxu0 0.0
  %261 = vmatpush2.msra.mxu0 0.0
  %262 = vmatprep.subr.mxu0 0.0
  %263 = vmatpush2.msra.mxu0 0.0
  %264 = vmatprep.subr.mxu0 0.0
  %265 = vmatpush2.msra.mxu0 0.0
  %266 = vmatprep.subr.mxu0 0.0
  %267 = vmatpush2.msra.mxu0 0.0
  %268 = vmatprep.subr.mxu0 0.0
  %269 = vmatpush2.msra.mxu0 0.0
  %270 = vmatprep.subr.mxu0 0.0
  %271 = vmatpush2.msra.mxu0 0.0
  %272 = vmatprep.subr.mxu0 0.0
  %273 = vmatpush2.msra.mxu0 0.0
  %274 = vmatprep.subr.mxu0 0.0
  %275 = vmatpush2.msra.mxu0 0.0
  %276 = vmatprep.mubr.f32.mxu0 0.0
  %v277 = vand.u32 %v43, 4294901760
  %278 = vmatmul.mubr.f32.gmra.mxu0 %v277
  %v279 = vpop.f32.mrf.mxu0
  %v280 = vadd.f32 %v138, %v279
  %v281 = vpop.f32.mrf.mxu0
  %v282 = vadd.f32 %v140, %v281
  %283 = vdwg.mxu0
  %284 = vmatprep.subr.mxu0 0.0
  %285 = vmatpush1.msra.mxu0 0.0
  %286 = vmatprep.subr.mxu0 0.0
  %287 = vmatpush1.msra.mxu0 0.0
  %288 = vmatprep.subr.mxu0 0.0
  %289 = vmatpush1.msra.mxu0 0.0
  %290 = vmatprep.subr.mxu0 0.0
  %291 = vmatpush1.msra.mxu0 0.0
  %292 = vmatprep.subr.mxu0 0.0
  %293 = vmatpush1.msra.mxu0 0.0
  %294 = vmatprep.subr.mxu0 0.0
  %295 = vmatpush1.msra.mxu0 0.0
  %296 = vmatprep.subr.mxu0 0.0
  %297 = vmatpush1.msra.mxu0 0.0
  %298 = vmatprep.subr.mxu0 0.0
  %299 = vmatpush1.msra.mxu0 0.0
  %300 = vmatprep.subr.mxu0 0.0
  %301 = vmatpush1.msra.mxu0 0.0
  %v302 = vand.u32 %v50, 4294901760
  %v303 = vsub.f32 %v50, %v302
  %304 = vmatprep.subr.mxu0 %v303
  %v305 = vand.u32 %v47, 4294901760
  %v306 = vsub.f32 %v47, %v305
  %307 = vmatpush1.msra.mxu0 %v306
  %v308 = vand.u32 %v26, 4294901760
  %v309 = vsub.f32 %v26, %v308
  %310 = vmatprep.subr.mxu0 %v309
  %v311 = vand.u32 %v25, 4294901760
  %v312 = vsub.f32 %v25, %v311
  %313 = vmatpush1.msra.mxu0 %v312
  %v314 = vand.u32 %v24, 4294901760
  %v315 = vsub.f32 %v24, %v314
  %316 = vmatprep.subr.mxu0 %v315
  %v317 = vand.u32 %v23, 4294901760
  %v318 = vsub.f32 %v23, %v317
  %319 = vmatpush1.msra.mxu0 %v318
  %v320 = vand.u32 %v22, 4294901760
  %v321 = vsub.f32 %v22, %v320
  %322 = vmatprep.subr.mxu0 %v321
  %v323 = vand.u32 %v21, 4294901760
  %v324 = vsub.f32 %v21, %v323
  %325 = vmatpush1.msra.mxu0 %v324
  %v326 = vand.u32 %v20, 4294901760
  %v327 = vsub.f32 %v20, %v326
  %328 = vmatprep.subr.mxu0 %v327
  %v329 = vand.u32 %v19, 4294901760
  %v330 = vsub.f32 %v19, %v329
  %331 = vmatpush1.msra.mxu0 %v330
  %v332 = vand.u32 %v18, 4294901760
  %v333 = vsub.f32 %v18, %v332
  %334 = vmatprep.subr.mxu0 %v333
  %v335 = vand.u32 %v17, 4294901760
  %v336 = vsub.f32 %v17, %v335
  %337 = vmatpush1.msra.mxu0 %v336
  %v338 = vand.u32 %v16, 4294901760
  %v339 = vsub.f32 %v16, %v338
  %340 = vmatprep.subr.mxu0 %v339
  %v341 = vand.u32 %v15, 4294901760
  %v342 = vsub.f32 %v15, %v341
  %343 = vmatpush1.msra.mxu0 %v342
  %344 = vmatprep.subr.mxu0 0.0
  %345 = vmatpush2.msra.mxu0 0.0
  %346 = vmatprep.subr.mxu0 0.0
  %347 = vmatpush2.msra.mxu0 0.0
  %348 = vmatprep.subr.mxu0 0.0
  %349 = vmatpush2.msra.mxu0 0.0
  %350 = vmatprep.subr.mxu0 0.0
  %351 = vmatpush2.msra.mxu0 0.0
  %352 = vmatprep.subr.mxu0 0.0
  %353 = vmatpush2.msra.mxu0 0.0
  %354 = vmatprep.subr.mxu0 0.0
  %355 = vmatpush2.msra.mxu0 0.0
  %356 = vmatprep.subr.mxu0 0.0
  %357 = vmatpush2.msra.mxu0 0.0
  %358 = vmatprep.subr.mxu0 0.0
  %359 = vmatpush2.msra.mxu0 0.0
  %360 = vmatprep.subr.mxu0 0.0
  %361 = vmatpush2.msra.mxu0 0.0
  %362 = vmatprep.subr.mxu0 0.0
  %363 = vmatpush2.msra.mxu0 0.0
  %364 = vmatprep.subr.mxu0 0.0
  %365 = vmatpush2.msra.mxu0 0.0
  %366 = vmatprep.subr.mxu0 0.0
  %367 = vmatpush2.msra.mxu0 0.0
  %368 = vmatprep.subr.mxu0 0.0
  %369 = vmatpush2.msra.mxu0 0.0
  %370 = vmatprep.subr.mxu0 0.0
  %371 = vmatpush2.msra.mxu0 0.0
  %372 = vmatprep.subr.mxu0 0.0
  %373 = vmatpush2.msra.mxu0 0.0
  %374 = vmatprep.subr.mxu0 0.0
  %375 = vmatpush2.msra.mxu0 0.0
  %376 = vmatprep.mubr.f32.mxu0 0.0
  %v377 = vand.u32 %v43, 4294901760
  %v378 = vsub.f32 %v43, %v377
  %379 = vmatmul.mubr.f32.gmra.mxu0 %v378
  %v380 = vpop.f32.mrf.mxu0
  %v381 = vadd.f32 %v280, %v380
  %v382 = vpop.f32.mrf.mxu0
  %v383 = vadd.f32 %v282, %v382
  %384 = vdwg.mxu0
  %385 = vmatprep.subr.mxu0 0.0
  %386 = vmatpush1.msra.mxu0 0.0
  %387 = vmatprep.subr.mxu0 0.0
  %388 = vmatpush1.msra.mxu0 0.0
  %389 = vmatprep.subr.mxu0 0.0
  %390 = vmatpush1.msra.mxu0 0.0
  %391 = vmatprep.subr.mxu0 0.0
  %392 = vmatpush1.msra.mxu0 0.0
  %393 = vmatprep.subr.mxu0 0.0
  %394 = vmatpush1.msra.mxu0 0.0
  %395 = vmatprep.subr.mxu0 0.0
  %396 = vmatpush1.msra.mxu0 0.0
  %397 = vmatprep.subr.mxu0 0.0
  %398 = vmatpush1.msra.mxu0 0.0
  %399 = vmatprep.subr.mxu0 0.0
  %400 = vmatpush1.msra.mxu0 0.0
  %401 = vmatprep.subr.mxu0 0.0
  %402 = vmatpush1.msra.mxu0 0.0
  %v403 = vand.u32 %v50, 4294901760
  %404 = vmatprep.subr.mxu0 %v403
  %v405 = vand.u32 %v47, 4294901760
  %406 = vmatpush1.msra.mxu0 %v405
  %v407 = vand.u32 %v26, 4294901760
  %408 = vmatprep.subr.mxu0 %v407
  %v409 = vand.u32 %v25, 4294901760
  %410 = vmatpush1.msra.mxu0 %v409
  %v411 = vand.u32 %v24, 4294901760
  %412 = vmatprep.subr.mxu0 %v411
  %v413 = vand.u32 %v23, 4294901760
  %414 = vmatpush1.msra.mxu0 %v413
  %v415 = vand.u32 %v22, 4294901760
  %416 = vmatprep.subr.mxu0 %v415
  %v417 = vand.u32 %v21, 4294901760
  %418 = vmatpush1.msra.mxu0 %v417
  %v419 = vand.u32 %v20, 4294901760
  %420 = vmatprep.subr.mxu0 %v419
  %v421 = vand.u32 %v19, 4294901760
  %422 = vmatpush1.msra.mxu0 %v421
  %v423 = vand.u32 %v18, 4294901760
  %424 = vmatprep.subr.mxu0 %v423
  %v425 = vand.u32 %v17, 4294901760
  %426 = vmatpush1.msra.mxu0 %v425
  %v427 = vand.u32 %v16, 4294901760
  %428 = vmatprep.subr.mxu0 %v427
  %v429 = vand.u32 %v15, 4294901760
  %430 = vmatpush1.msra.mxu0 %v429
  %431 = vmatprep.subr.mxu0 0.0
  %432 = vmatpush2.msra.mxu0 0.0
  %433 = vmatprep.subr.mxu0 0.0
  %434 = vmatpush2.msra.mxu0 0.0
  %435 = vmatprep.subr.mxu0 0.0
  %436 = vmatpush2.msra.mxu0 0.0
  %437 = vmatprep.subr.mxu0 0.0
  %438 = vmatpush2.msra.mxu0 0.0
  %439 = vmatprep.subr.mxu0 0.0
  %440 = vmatpush2.msra.mxu0 0.0
  %441 = vmatprep.subr.mxu0 0.0
  %442 = vmatpush2.msra.mxu0 0.0
  %443 = vmatprep.subr.mxu0 0.0
  %444 = vmatpush2.msra.mxu0 0.0
  %445 = vmatprep.subr.mxu0 0.0
  %446 = vmatpush2.msra.mxu0 0.0
  %447 = vmatprep.subr.mxu0 0.0
  %448 = vmatpush2.msra.mxu0 0.0
  %449 = vmatprep.subr.mxu0 0.0
  %450 = vmatpush2.msra.mxu0 0.0
  %451 = vmatprep.subr.mxu0 0.0
  %452 = vmatpush2.msra.mxu0 0.0
  %453 = vmatprep.subr.mxu0 0.0
  %454 = vmatpush2.msra.mxu0 0.0
  %455 = vmatprep.subr.mxu0 0.0
  %456 = vmatpush2.msra.mxu0 0.0
  %457 = vmatprep.subr.mxu0 0.0
  %458 = vmatpush2.msra.mxu0 0.0
  %459 = vmatprep.subr.mxu0 0.0
  %460 = vmatpush2.msra.mxu0 0.0
  %461 = vmatprep.subr.mxu0 0.0
  %462 = vmatpush2.msra.mxu0 0.0
  %463 = vmatprep.mubr.f32.mxu0 0.0
  %v464 = vand.u32 %v43, 4294901760
  %v465 = vsub.f32 %v43, %v464
  %v466 = vand.u32 %v465, 4294901760
  %467 = vmatmul.mubr.f32.gmra.mxu0 %v466
  %v468 = vpop.f32.mrf.mxu0
  %v469 = vadd.f32 %v381, %v468
  %v470 = vpop.f32.mrf.mxu0
  %v471 = vadd.f32 %v383, %v470
  %472 = vdwg.mxu0
  %473 = vmatprep.subr.mxu0 0.0
  %474 = vmatpush1.msra.mxu0 0.0
  %475 = vmatprep.subr.mxu0 0.0
  %476 = vmatpush1.msra.mxu0 0.0
  %477 = vmatprep.subr.mxu0 0.0
  %478 = vmatpush1.msra.mxu0 0.0
  %479 = vmatprep.subr.mxu0 0.0
  %480 = vmatpush1.msra.mxu0 0.0
  %481 = vmatprep.subr.mxu0 0.0
  %482 = vmatpush1.msra.mxu0 0.0
  %483 = vmatprep.subr.mxu0 0.0
  %484 = vmatpush1.msra.mxu0 0.0
  %485 = vmatprep.subr.mxu0 0.0
  %486 = vmatpush1.msra.mxu0 0.0
  %487 = vmatprep.subr.mxu0 0.0
  %488 = vmatpush1.msra.mxu0 0.0
  %489 = vmatprep.subr.mxu0 0.0
  %490 = vmatpush1.msra.mxu0 0.0
  %v491 = vand.u32 %v50, 4294901760
  %v492 = vsub.f32 %v50, %v491
  %v493 = vand.u32 %v492, 4294901760
  %494 = vmatprep.subr.mxu0 %v493
  %v495 = vand.u32 %v47, 4294901760
  %v496 = vsub.f32 %v47, %v495
  %v497 = vand.u32 %v496, 4294901760
  %498 = vmatpush1.msra.mxu0 %v497
  %v499 = vand.u32 %v26, 4294901760
  %v500 = vsub.f32 %v26, %v499
  %v501 = vand.u32 %v500, 4294901760
  %502 = vmatprep.subr.mxu0 %v501
  %v503 = vand.u32 %v25, 4294901760
  %v504 = vsub.f32 %v25, %v503
  %v505 = vand.u32 %v504, 4294901760
  %506 = vmatpush1.msra.mxu0 %v505
  %v507 = vand.u32 %v24, 4294901760
  %v508 = vsub.f32 %v24, %v507
  %v509 = vand.u32 %v508, 4294901760
  %510 = vmatprep.subr.mxu0 %v509
  %v511 = vand.u32 %v23, 4294901760
  %v512 = vsub.f32 %v23, %v511
  %v513 = vand.u32 %v512, 4294901760
  %514 = vmatpush1.msra.mxu0 %v513
  %v515 = vand.u32 %v22, 4294901760
  %v516 = vsub.f32 %v22, %v515
  %v517 = vand.u32 %v516, 4294901760
  %518 = vmatprep.subr.mxu0 %v517
  %v519 = vand.u32 %v21, 4294901760
  %v520 = vsub.f32 %v21, %v519
  %v521 = vand.u32 %v520, 4294901760
  %522 = vmatpush1.msra.mxu0 %v521
  %v523 = vand.u32 %v20, 4294901760
  %v524 = vsub.f32 %v20, %v523
  %v525 = vand.u32 %v524, 4294901760
  %526 = vmatprep.subr.mxu0 %v525
  %v527 = vand.u32 %v19, 4294901760
  %v528 = vsub.f32 %v19, %v527
  %v529 = vand.u32 %v528, 4294901760
  %530 = vmatpush1.msra.mxu0 %v529
  %v531 = vand.u32 %v18, 4294901760
  %v532 = vsub.f32 %v18, %v531
  %v533 = vand.u32 %v532, 4294901760
  %534 = vmatprep.subr.mxu0 %v533
  %v535 = vand.u32 %v17, 4294901760
  %v536 = vsub.f32 %v17, %v535
  %v537 = vand.u32 %v536, 4294901760
  %538 = vmatpush1.msra.mxu0 %v537
  %v539 = vand.u32 %v16, 4294901760
  %v540 = vsub.f32 %v16, %v539
  %v541 = vand.u32 %v540, 4294901760
  %542 = vmatprep.subr.mxu0 %v541
  %v543 = vand.u32 %v15, 4294901760
  %v544 = vsub.f32 %v15, %v543
  %v545 = vand.u32 %v544, 4294901760
  %546 = vmatpush1.msra.mxu0 %v545
  %547 = vmatprep.subr.mxu0 0.0
  %548 = vmatpush2.msra.mxu0 0.0
  %549 = vmatprep.subr.mxu0 0.0
  %550 = vmatpush2.msra.mxu0 0.0
  %551 = vmatprep.subr.mxu0 0.0
  %552 = vmatpush2.msra.mxu0 0.0
  %553 = vmatprep.subr.mxu0 0.0
  %554 = vmatpush2.msra.mxu0 0.0
  %555 = vmatprep.subr.mxu0 0.0
  %556 = vmatpush2.msra.mxu0 0.0
  %557 = vmatprep.subr.mxu0 0.0
  %558 = vmatpush2.msra.mxu0 0.0
  %559 = vmatprep.subr.mxu0 0.0
  %560 = vmatpush2.msra.mxu0 0.0
  %561 = vmatprep.subr.mxu0 0.0
  %562 = vmatpush2.msra.mxu0 0.0
  %563 = vmatprep.subr.mxu0 0.0
  %564 = vmatpush2.msra.mxu0 0.0
  %565 = vmatprep.subr.mxu0 0.0
  %566 = vmatpush2.msra.mxu0 0.0
  %567 = vmatprep.subr.mxu0 0.0
  %568 = vmatpush2.msra.mxu0 0.0
  %569 = vmatprep.subr.mxu0 0.0
  %570 = vmatpush2.msra.mxu0 0.0
  %571 = vmatprep.subr.mxu0 0.0
  %572 = vmatpush2.msra.mxu0 0.0
  %573 = vmatprep.subr.mxu0 0.0
  %574 = vmatpush2.msra.mxu0 0.0
  %575 = vmatprep.subr.mxu0 0.0
  %576 = vmatpush2.msra.mxu0 0.0
  %577 = vmatprep.subr.mxu0 0.0
  %578 = vmatpush2.msra.mxu0 0.0
  %579 = vmatprep.mubr.f32.mxu0 0.0
  %v580 = vand.u32 %v43, 4294901760
  %581 = vmatmul.mubr.f32.gmra.mxu0 %v580
  %v582 = vpop.f32.mrf.mxu0
  %v583 = vadd.f32 %v469, %v582
  %v584 = vpop.f32.mrf.mxu0
  %v585 = vadd.f32 %v471, %v584
  %586 = vdwg.mxu0
  %587 = vmatprep.subr.mxu0 0.0
  %588 = vmatpush1.msra.mxu0 0.0
  %589 = vmatprep.subr.mxu0 0.0
  %590 = vmatpush1.msra.mxu0 0.0
  %591 = vmatprep.subr.mxu0 0.0
  %592 = vmatpush1.msra.mxu0 0.0
  %593 = vmatprep.subr.mxu0 0.0
  %594 = vmatpush1.msra.mxu0 0.0
  %595 = vmatprep.subr.mxu0 0.0
  %596 = vmatpush1.msra.mxu0 0.0
  %597 = vmatprep.subr.mxu0 0.0
  %598 = vmatpush1.msra.mxu0 0.0
  %599 = vmatprep.subr.mxu0 0.0
  %600 = vmatpush1.msra.mxu0 0.0
  %601 = vmatprep.subr.mxu0 0.0
  %602 = vmatpush1.msra.mxu0 0.0
  %603 = vmatprep.subr.mxu0 0.0
  %604 = vmatpush1.msra.mxu0 0.0
  %v605 = vand.u32 %v50, 4294901760
  %606 = vmatprep.subr.mxu0 %v605
  %v607 = vand.u32 %v47, 4294901760
  %608 = vmatpush1.msra.mxu0 %v607
  %v609 = vand.u32 %v26, 4294901760
  %610 = vmatprep.subr.mxu0 %v609
  %v611 = vand.u32 %v25, 4294901760
  %612 = vmatpush1.msra.mxu0 %v611
  %v613 = vand.u32 %v24, 4294901760
  %614 = vmatprep.subr.mxu0 %v613
  %v615 = vand.u32 %v23, 4294901760
  %616 = vmatpush1.msra.mxu0 %v615
  %v617 = vand.u32 %v22, 4294901760
  %618 = vmatprep.subr.mxu0 %v617
  %v619 = vand.u32 %v21, 4294901760
  %620 = vmatpush1.msra.mxu0 %v619
  %v621 = vand.u32 %v20, 4294901760
  %622 = vmatprep.subr.mxu0 %v621
  %v623 = vand.u32 %v19, 4294901760
  %624 = vmatpush1.msra.mxu0 %v623
  %v625 = vand.u32 %v18, 4294901760
  %626 = vmatprep.subr.mxu0 %v625
  %v627 = vand.u32 %v17, 4294901760
  %628 = vmatpush1.msra.mxu0 %v627
  %v629 = vand.u32 %v16, 4294901760
  %630 = vmatprep.subr.mxu0 %v629
  %v631 = vand.u32 %v15, 4294901760
  %632 = vmatpush1.msra.mxu0 %v631
  %633 = vmatprep.subr.mxu0 0.0
  %634 = vmatpush2.msra.mxu0 0.0
  %635 = vmatprep.subr.mxu0 0.0
  %636 = vmatpush2.msra.mxu0 0.0
  %637 = vmatprep.subr.mxu0 0.0
  %638 = vmatpush2.msra.mxu0 0.0
  %639 = vmatprep.subr.mxu0 0.0
  %640 = vmatpush2.msra.mxu0 0.0
  %641 = vmatprep.subr.mxu0 0.0
  %642 = vmatpush2.msra.mxu0 0.0
  %643 = vmatprep.subr.mxu0 0.0
  %644 = vmatpush2.msra.mxu0 0.0
  %645 = vmatprep.subr.mxu0 0.0
  %646 = vmatpush2.msra.mxu0 0.0
  %647 = vmatprep.subr.mxu0 0.0
  %648 = vmatpush2.msra.mxu0 0.0
  %649 = vmatprep.subr.mxu0 0.0
  %650 = vmatpush2.msra.mxu0 0.0
  %651 = vmatprep.subr.mxu0 0.0
  %652 = vmatpush2.msra.mxu0 0.0
  %653 = vmatprep.subr.mxu0 0.0
  %654 = vmatpush2.msra.mxu0 0.0
  %655 = vmatprep.subr.mxu0 0.0
  %656 = vmatpush2.msra.mxu0 0.0
  %657 = vmatprep.subr.mxu0 0.0
  %658 = vmatpush2.msra.mxu0 0.0
  %659 = vmatprep.subr.mxu0 0.0
  %660 = vmatpush2.msra.mxu0 0.0
  %661 = vmatprep.subr.mxu0 0.0
  %662 = vmatpush2.msra.mxu0 0.0
  %663 = vmatprep.subr.mxu0 0.0
  %664 = vmatpush2.msra.mxu0 0.0
  %665 = vmatprep.mubr.f32.mxu0 0.0
  %v666 = vand.u32 %v43, 4294901760
  %667 = vmatmul.mubr.f32.gmra.mxu0 %v666
  %v668 = vpop.f32.mrf.mxu0
  %v669 = vadd.f32 %v583, %v668
  %v670 = vpop.f32.mrf.mxu0
  %v671 = vadd.f32 %v585, %v670
  %672 = vdwg.mxu0
  %673 = vst [vmem:[%s3] sm:$0xff] %v669
  %vm674 = vcmask 621568
  %675 = vst.msk [vmem:[%s3 + $0x8] sm:$0xff] %vm674, %v671
  // Predicated region
  $region14: #{deformable_head_keypoints.1} parent=0 // pred_check
    _
  $region15: #{deformable_head_keypoints.1} parent=0 // pred_check_branch
    %677 = sbr.rel (0) target = $region17
  $region16: #{deformable_head_keypoints.1} parent=0 // pred_region
    _
  $region17: #{deformable_head_keypoints.1} parent=0 // pred_fallthru
    _
  // Predicated region
  $region18: #{deformable_head_keypoints.1} parent=0 // pred_check
    _
  $region19: #{deformable_head_keypoints.1} parent=0 // pred_check_branch
    %679 = sbr.rel (0) target = $region21
  $region20: #{deformable_head_keypoints.1} parent=0 // pred_region
    _
  $region21: #{deformable_head_keypoints.1} parent=0 // pred_fallthru
    _

</llo_original>
